<compile_context>
chip_gen: v5e
topology: v5e:2x2
jax: 0.10.0
libtpu: 0.0.40
codegen_flags: <defaults>
</compile_context>

<pallas_src>
import functools

import jax
import jax.numpy as jnp
from jax.experimental import pallas as pl
from jax.experimental.pallas import tpu as pltpu

HIDDEN = 64          # self.hidden in the PyTorch module
LANE = 2 * HIDDEN    # fused hidden width == 128 == vreg lane width
MAX_ROW_TILE = 1024  # rows per grid step for large batches


def _round_up(n, m):
    return ((n + m - 1) // m) * m


# --------------------------------------------------------------------------
# Kernel: fused 128-wide actor+critic MLP on one (TB, S) row tile.
# --------------------------------------------------------------------------
def _fused_mlp_kernel(x_ref, w1_ref, b1_ref, w2_ref, b2_ref, w3_ref, b3_ref,
                      out_ref, *, compute_dtype):
    cd = compute_dtype
    x = x_ref[...].astype(cd)                                     # (TB, S)

    # layer 1: (TB, S) @ (S, 128) -> tanh, f32 bias/activation math
    h = jnp.dot(x, w1_ref[...].astype(cd),
                preferred_element_type=jnp.float32) + b1_ref[...]
    h = jnp.tanh(h)                                               # (TB, 128) f32

    # layer 2: block-diagonal (128, 128) keeps actor/critic independent
    h = jnp.dot(h.astype(cd), w2_ref[...].astype(cd),
                preferred_element_type=jnp.float32) + b2_ref[...]
    h = jnp.tanh(h)                                               # (TB, 128) f32

    # layer 3: lane-dense (128, 128) output slab (mean | value | zero pad)
    out_ref[...] = (jnp.dot(h.astype(cd), w3_ref[...].astype(cd),
                            preferred_element_type=jnp.float32) + b3_ref[...])


# --------------------------------------------------------------------------
# Parameter construction / fusion
# --------------------------------------------------------------------------
def init_policy_ac_params(key, state_space, action_space, hidden=HIDDEN):
    """Deterministic synthetic init mirroring Policy_ac.init_weights():
    Linear weights ~ N(0, 1), biases = 0, sigma = 0.5.
    Weights are stored (in_features, out_features): forward does x @ W + b."""
    ks = jax.random.split(key, 6)
    f32 = jnp.float32
    return {
        # actor
        "w1a": jax.random.normal(ks[0], (state_space, hidden), f32),
        "b1a": jnp.zeros((1, hidden), f32),
        "w2a": jax.random.normal(ks[1], (hidden, hidden), f32),
        "b2a": jnp.zeros((1, hidden), f32),
        "w3a": jax.random.normal(ks[2], (hidden, action_space), f32),
        "b3a": jnp.zeros((1, action_space), f32),
        # critic
        "w1c": jax.random.normal(ks[3], (state_space, hidden), f32),
        "b1c": jnp.zeros((1, hidden), f32),
        "w2c": jax.random.normal(ks[4], (hidden, hidden), f32),
        "b2c": jnp.zeros((1, hidden), f32),
        "w3c": jax.random.normal(ks[5], (hidden, 1), f32),
        "b3c": jnp.zeros((1, 1), f32),
        # sigma parameter (kept 2-D (1, A) for TPU friendliness)
        "sigma": jnp.full((1, action_space), 0.5, f32),
    }


def fuse_policy_ac_params(params, hidden=HIDDEN):
    """One-time fusion of the actor+critic weights into a 128-wide
    block-diagonal network with lane-dense (128-wide) layer-3 output."""
    f32 = jnp.float32
    action_space = params["w3a"].shape[1]
    assert 2 * hidden == LANE

    w1 = jnp.concatenate([params["w1a"], params["w1c"]], axis=1)      # (S, 128)
    b1 = jnp.concatenate([params["b1a"], params["b1c"]], axis=1)      # (1, 128)

    w2 = jnp.zeros((LANE, LANE), f32)
    w2 = w2.at[:hidden, :hidden].set(params["w2a"])
    w2 = w2.at[hidden:, hidden:].set(params["w2c"])                   # (128, 128)
    b2 = jnp.concatenate([params["b2a"], params["b2c"]], axis=1)      # (1, 128)

    # Layer 3: mean goes to lanes 0..A-1, value to lane A, rest is zero pad.
    w3 = jnp.zeros((LANE, LANE), f32)
    w3 = w3.at[:hidden, :action_space].set(params["w3a"])
    w3 = w3.at[hidden:, action_space:action_space + 1].set(params["w3c"])
    b3 = jnp.zeros((1, LANE), f32)
    b3 = b3.at[0, :action_space].set(params["b3a"][0])
    b3 = b3.at[0, action_space].set(params["b3c"][0, 0])

    return {"W1": w1, "b1": b1, "W2": w2, "b2": b2, "W3": w3, "b3": b3,
            "sigma": params["sigma"]}


# --------------------------------------------------------------------------
# Forward wrapper
# --------------------------------------------------------------------------
def policy_ac_forward(x, fused, action_space, *, use_bf16=False):
    """Returns (action_mean (B,A), sigma (1,A), state_value (B,1)).
    action_mean + sigma are the Normal distribution parameters the PyTorch
    module returns.  Set use_bf16=True to run the MXU matmuls in bfloat16
    (f32 accumulation, f32 tanh/bias) on v6e/v7x for extra throughput."""
    batch, state_space = x.shape

    # Row-tile the batch; pad rows up so the tile evenly divides the batch.
    tb = min(MAX_ROW_TILE, _round_up(batch, 8))
    b_pad = _round_up(batch, tb)
    if b_pad != batch:
        x = jnp.pad(x, ((0, b_pad - batch), (0, 0)))
    grid = (b_pad // tb,)

    compute_dtype = jnp.bfloat16 if use_bf16 else jnp.float32
    kernel = functools.partial(_fused_mlp_kernel, compute_dtype=compute_dtype)

    # Weights/biases use constant index maps -> loaded once, VMEM-resident.
    const2d = lambda i: (0, 0)
    in_specs = [
        pl.BlockSpec((tb, state_space), lambda i: (i, 0)),   # x row tile
        pl.BlockSpec((state_space, LANE), const2d),          # W1
        pl.BlockSpec((1, LANE), const2d),                    # b1
        pl.BlockSpec((LANE, LANE), const2d),                 # W2
        pl.BlockSpec((1, LANE), const2d),                    # b2
        pl.BlockSpec((LANE, LANE), const2d),                 # W3
        pl.BlockSpec((1, LANE), const2d),                    # b3
    ]

    out = pl.pallas_call(
        kernel,
        out_shape=jax.ShapeDtypeStruct((b_pad, LANE), jnp.float32),
        grid=grid,
        in_specs=in_specs,
        out_specs=pl.BlockSpec((tb, LANE), lambda i: (i, 0)),
        compiler_params=pltpu.CompilerParams(
            dimension_semantics=("parallel",)),
    )(x, fused["W1"], fused["b1"], fused["W2"], fused["b2"],
      fused["W3"], fused["b3"])

    action_mean = out[:batch, :action_space]
    state_value = out[:batch, action_space:action_space + 1]
    # sigma is batch-independent -> computed outside the kernel.
    sigma = jax.nn.softplus(fused["sigma"])
    return action_mean, sigma, state_value


# --------------------------------------------------------------------------
# Pure-JAX reference (unfused) for correctness checking
# --------------------------------------------------------------------------
def _reference_forward(x, params):
    h = jnp.tanh(x @ params["w1a"] + params["b1a"])
    h = jnp.tanh(h @ params["w2a"] + params["b2a"])
    mean = h @ params["w3a"] + params["b3a"]
    sigma = jax.nn.softplus(params["sigma"])
    c = jnp.tanh(x @ params["w1c"] + params["b1c"])
    c = jnp.tanh(c @ params["w2c"] + params["b2c"])
    value = c @ params["w3c"] + params["b3c"]
    return mean, sigma, value


if __name__ == "__main__":
    # Small shapes consistent with the module: batch=2, state_space=8, action_space=4.
    B, STATE_SPACE, ACTION_SPACE = 2, 8, 4

    key = jax.random.PRNGKey(0)
    k_params, k_x = jax.random.split(key)

    params = init_policy_ac_params(k_params, STATE_SPACE, ACTION_SPACE)
    fused = fuse_policy_ac_params(params)   # one-time fusion, not per call
    x = jax.random.normal(k_x, (B, STATE_SPACE), jnp.float32)

    mean, sigma, value = policy_ac_forward(x, fused, ACTION_SPACE)
    jax.block_until_ready((mean, sigma, value))

    # Sanity check against the unfused pure-JAX reference.
    mean_r, sigma_r, value_r = _reference_forward(x, params)
    assert mean.shape == (B, ACTION_SPACE) and value.shape == (B, 1)
    assert jnp.allclose(mean, mean_r, atol=1e-4, rtol=1e-4)
    assert jnp.allclose(sigma, sigma_r, atol=1e-5, rtol=1e-5)
    assert jnp.allclose(value, value_r, atol=1e-4, rtol=1e-4)

    # TODO(synk): torch.distributions.Normal object construction has no kernel
    # equivalent; the kernel returns its parameters (action_mean, sigma) instead.

    print("KERNEL_OK")
</pallas_src>

<mosaic_0001>
module attributes {stable_mosaic.version = 11 : i64} {
  func.func @_fused_mlp_kernel(%arg0: i32, %arg1: memref<8x8xf32, #tpu.memory_space<vmem>>, %arg2: memref<8x128xf32, #tpu.memory_space<vmem>>, %arg3: memref<1x128xf32, #tpu.memory_space<vmem>>, %arg4: memref<128x128xf32, #tpu.memory_space<vmem>>, %arg5: memref<1x128xf32, #tpu.memory_space<vmem>>, %arg6: memref<128x128xf32, #tpu.memory_space<vmem>>, %arg7: memref<1x128xf32, #tpu.memory_space<vmem>>, %arg8: memref<8x128xf32, #tpu.memory_space<vmem>>) attributes {dimension_semantics = [#tpu.dimension_semantics<parallel>], iteration_bounds = array<i64: 1>, scalar_prefetch = 0 : i64, scratch_operands = 0 : i64, tpu.core_type = #tpu.core_type<tc>, window_params = [{transform_indices = @transform_0, window_bounds = array<i64: 8, 8>}, {pipeline_mode = #tpu.pipeline_mode<synchronous>, transform_indices = @transform_1, window_bounds = array<i64: 8, 128>}, {pipeline_mode = #tpu.pipeline_mode<synchronous>, transform_indices = @transform_2, window_bounds = array<i64: 1, 128>}, {pipeline_mode = #tpu.pipeline_mode<synchronous>, transform_indices = @transform_3, window_bounds = array<i64: 128, 128>}, {pipeline_mode = #tpu.pipeline_mode<synchronous>, transform_indices = @transform_4, window_bounds = array<i64: 1, 128>}, {pipeline_mode = #tpu.pipeline_mode<synchronous>, transform_indices = @transform_5, window_bounds = array<i64: 128, 128>}, {pipeline_mode = #tpu.pipeline_mode<synchronous>, transform_indices = @transform_6, window_bounds = array<i64: 1, 128>}, {transform_indices = @transform_7, window_bounds = array<i64: 8, 128>}]} {
    %c0 = arith.constant 0 : index
    %c0_0 = arith.constant 0 : index
    %0 = vector.load %arg1[%c0, %c0_0] : memref<8x8xf32, #tpu.memory_space<vmem>>, vector<8x8xf32>
    %c0_1 = arith.constant 0 : index
    %c0_2 = arith.constant 0 : index
    %1 = vector.load %arg2[%c0_1, %c0_2] : memref<8x128xf32, #tpu.memory_space<vmem>>, vector<8x128xf32>
    %cst = arith.constant dense<0.000000e+00> : vector<8x128xf32>
    %2 = tpu.matmul %0, %1, %cst {dimension_numbers = #tpu.dot_dimension_numbers<[1], [0], [0], [1], [0, 0, 1, 1], [], []>} : vector<8x8xf32>, vector<8x128xf32>, vector<8x128xf32> -> vector<8x128xf32>
    %c0_3 = arith.constant 0 : index
    %c0_4 = arith.constant 0 : index
    %3 = vector.load %arg3[%c0_3, %c0_4] : memref<1x128xf32, #tpu.memory_space<vmem>>, vector<1x128xf32>
    %4 = vector.broadcast %3 : vector<1x128xf32> to vector<8x128xf32>
    %5 = arith.addf %2, %4 : vector<8x128xf32>
    %6 = math.tanh %5 : vector<8x128xf32>
    %c0_5 = arith.constant 0 : index
    %c0_6 = arith.constant 0 : index
    %7 = vector.load %arg4[%c0_5, %c0_6] : memref<128x128xf32, #tpu.memory_space<vmem>>, vector<128x128xf32>
    %cst_7 = arith.constant dense<0.000000e+00> : vector<8x128xf32>
    %8 = tpu.matmul %6, %7, %cst_7 {dimension_numbers = #tpu.dot_dimension_numbers<[1], [0], [0], [1], [0, 0, 1, 1], [], []>} : vector<8x128xf32>, vector<128x128xf32>, vector<8x128xf32> -> vector<8x128xf32>
    %c0_8 = arith.constant 0 : index
    %c0_9 = arith.constant 0 : index
    %9 = vector.load %arg5[%c0_8, %c0_9] : memref<1x128xf32, #tpu.memory_space<vmem>>, vector<1x128xf32>
    %10 = vector.broadcast %9 : vector<1x128xf32> to vector<8x128xf32>
    %11 = arith.addf %8, %10 : vector<8x128xf32>
    %12 = math.tanh %11 : vector<8x128xf32>
    %c0_10 = arith.constant 0 : index
    %c0_11 = arith.constant 0 : index
    %13 = vector.load %arg6[%c0_10, %c0_11] : memref<128x128xf32, #tpu.memory_space<vmem>>, vector<128x128xf32>
    %cst_12 = arith.constant dense<0.000000e+00> : vector<8x128xf32>
    %14 = tpu.matmul %12, %13, %cst_12 {dimension_numbers = #tpu.dot_dimension_numbers<[1], [0], [0], [1], [0, 0, 1, 1], [], []>} : vector<8x128xf32>, vector<128x128xf32>, vector<8x128xf32> -> vector<8x128xf32>
    %c0_13 = arith.constant 0 : index
    %c0_14 = arith.constant 0 : index
    %15 = vector.load %arg7[%c0_13, %c0_14] : memref<1x128xf32, #tpu.memory_space<vmem>>, vector<1x128xf32>
    %16 = vector.broadcast %15 : vector<1x128xf32> to vector<8x128xf32>
    %17 = arith.addf %14, %16 : vector<8x128xf32>
    %c0_15 = arith.constant 0 : index
    %c0_16 = arith.constant 0 : index
    %18 = vector.load %arg8[%c0_15, %c0_16] : memref<8x128xf32, #tpu.memory_space<vmem>>, vector<8x128xf32>
    tpu.vector_store %arg8[%c0_15, %c0_16], %17 {strides = array<i32>} : memref<8x128xf32, #tpu.memory_space<vmem>>, vector<8x128xf32>,
    return
  }
  func.func @transform_0(%arg0: i32) -> (i32, i32) {
    %c0_i32 = arith.constant 0 : i32
    %c0_i32_0 = arith.constant 0 : i32
    return %arg0, %c0_i32 : i32, i32
  }
  func.func @transform_1(%arg0: i32) -> (i32, i32) {
    %c0_i32 = arith.constant 0 : i32
    %c0_i32_0 = arith.constant 0 : i32
    %c0_i32_1 = arith.constant 0 : i32
    return %c0_i32, %c0_i32_0 : i32, i32
  }
  func.func @transform_2(%arg0: i32) -> (i32, i32) {
    %c0_i32 = arith.constant 0 : i32
    %c0_i32_0 = arith.constant 0 : i32
    %c0_i32_1 = arith.constant 0 : i32
    return %c0_i32, %c0_i32_0 : i32, i32
  }
  func.func @transform_3(%arg0: i32) -> (i32, i32) {
    %c0_i32 = arith.constant 0 : i32
    %c0_i32_0 = arith.constant 0 : i32
    %c0_i32_1 = arith.constant 0 : i32
    return %c0_i32, %c0_i32_0 : i32, i32
  }
  func.func @transform_4(%arg0: i32) -> (i32, i32) {
    %c0_i32 = arith.constant 0 : i32
    %c0_i32_0 = arith.constant 0 : i32
    %c0_i32_1 = arith.constant 0 : i32
    return %c0_i32, %c0_i32_0 : i32, i32
  }
  func.func @transform_5(%arg0: i32) -> (i32, i32) {
    %c0_i32 = arith.constant 0 : i32
    %c0_i32_0 = arith.constant 0 : i32
    %c0_i32_1 = arith.constant 0 : i32
    return %c0_i32, %c0_i32_0 : i32, i32
  }
  func.func @transform_6(%arg0: i32) -> (i32, i32) {
    %c0_i32 = arith.constant 0 : i32
    %c0_i32_0 = arith.constant 0 : i32
    %c0_i32_1 = arith.constant 0 : i32
    return %c0_i32, %c0_i32_0 : i32, i32
  }
  func.func @transform_7(%arg0: i32) -> (i32, i32) {
    %c0_i32 = arith.constant 0 : i32
    %c0_i32_0 = arith.constant 0 : i32
    return %arg0, %c0_i32 : i32, i32
  }
}

</mosaic_0001>

<llo_original>
// kernel: tpu_custom_call.1
$region0: #{tpu_custom_call.1}
  #allocation0 [shape = 'u32[]', space=smem, size = 0x4, offset = 0x4, fixed_abs, tag = 'smem constant byte address 0x4 - core index']
  #allocation1 [shape = 'u32[72,128]{1,0:T(1,128)}', space=vmem, size = 0x9000, scoped, tag = 'internal scratch']
  %s0 = inlined_call_operand.hbm [shape: f32[8,8], index: 0, kind: input, shape index: {}]
  %s1 = inlined_call_operand.hbm [shape: f32[8,128], index: 1, kind: input, shape index: {}]
  %s2 = inlined_call_operand.vmem [shape: f32[1,128], index: 2, kind: input, shape index: {}]
  %s3 = inlined_call_operand.hbm [shape: f32[128,128], index: 3, kind: input, shape index: {}]
  %s4 = inlined_call_operand.vmem [shape: f32[1,128], index: 4, kind: input, shape index: {}]
  %s5 = inlined_call_operand.hbm [shape: f32[128,128], index: 5, kind: input, shape index: {}]
  %s6 = inlined_call_operand.vmem [shape: f32[1,128], index: 6, kind: input, shape index: {}]
  %s7 = inlined_call_operand.hbm [shape: f32[8,128], index: 7, kind: output, shape index: {}]
  %s8 = sld [smem:[#allocation0]]
  $region54: #{tpu_custom_call.1} parent=0
    _
  %s10 = ssub.s32 1, %s8
  %s11 = scalar_select 0, %s10, %s8
  $region1: #{tpu_custom_call.1} parent=0
    #allocation2 [shape = 'u8[4096]{0}', space=vmem, size = 0x1000, scoped, tag = 'input window, operand 0, single buffered']
    #allocation3 [shape = 's32[1]{0}', space=sflag, size = 0x4, scoped, tag = 'scoped memory for tpu_custom_call.1']
    #allocation4 [shape = 's32[1]{0}', space=sflag, size = 0x4, scoped, tag = 'scoped memory for tpu_custom_call.1']
    #allocation5 [shape = 'u8[4096]{0}', space=vmem, size = 0x1000, scoped, tag = 'input window, operand 1, single buffered']
    #allocation6 [shape = 's32[1]{0}', space=sflag, size = 0x4, scoped, tag = 'scoped memory for tpu_custom_call.1']
    #allocation7 [shape = 'u8[65536]{0}', space=vmem, size = 0x10000, scoped, tag = 'input window, operand 3, single buffered']
    #allocation8 [shape = 'u8[65536]{0}', space=vmem, size = 0x10000, scoped, tag = 'input window, operand 5, single buffered']
    #allocation9 [shape = 's32[1]{0}', space=sflag, size = 0x4, scoped, tag = 'scoped memory for tpu_custom_call.1']
    #allocation10 [shape = 'u8[4096]{0}', space=vmem, size = 0x1000, scoped, tag = 'output window, operand 0, single buffered']
    %12 = vsyncpa [#allocation3], 0
    %13 = vsyncpa [#allocation6], 0
    %14 = vsyncpa [#allocation9], 0
    %15 = vsyncpa [#allocation4], 0
    // Predicated region
    $region2: #{tpu_custom_call.1} parent=1 // pred_check
      _
    $region3: #{tpu_custom_call.1} parent=1 // pred_check_branch
      %17 = sbr.rel (0) target = $region5
    $region4: #{tpu_custom_call.1} parent=1 // pred_region
      %19 = vsyncadd [#allocation3], 0
      %s21 = sshll.u32 %s0, 4
      %s22 = int_to_ptr.hbm [resolvable:$true] %s21
      %s23 = sshll.u32 [#allocation2], 4
      %s24 = int_to_ptr.vmem [resolvable:$true] %s23
      %26 = dma.hbm_to_vmem [thread:$0]  %s22, 128, %s24, [#allocation3]
    $region5: #{tpu_custom_call.1} parent=1 // pred_fallthru
      _
    // Predicated region
    $region6: #{tpu_custom_call.1} parent=1 // pred_check
      _
    $region7: #{tpu_custom_call.1} parent=1 // pred_check_branch
      %28 = sbr.rel (0) target = $region9
    $region8: #{tpu_custom_call.1} parent=1 // pred_region
      %30 = vsyncadd [#allocation6], 0
      %s32 = sshll.u32 %s1, 4
      %s33 = int_to_ptr.hbm [resolvable:$true] %s32
      %s34 = sshll.u32 [#allocation5], 4
      %s35 = int_to_ptr.vmem [resolvable:$true] %s34
      %37 = dma.hbm_to_vmem [thread:$0]  %s33, 128, %s35, [#allocation6]
    $region9: #{tpu_custom_call.1} parent=1 // pred_fallthru
      _
    // Predicated region
    $region10: #{tpu_custom_call.1} parent=1 // pred_check
      _
    $region11: #{tpu_custom_call.1} parent=1 // pred_check_branch
      %39 = sbr.rel (0) target = $region13
    $region12: #{tpu_custom_call.1} parent=1 // pred_region
      _
    $region13: #{tpu_custom_call.1} parent=1 // pred_fallthru
      _
    // Predicated region
    $region14: #{tpu_custom_call.1} parent=1 // pred_check
      _
    $region15: #{tpu_custom_call.1} parent=1 // pred_check_branch
      %41 = sbr.rel (0) target = $region17
    $region16: #{tpu_custom_call.1} parent=1 // pred_region
      %43 = vsyncadd [#allocation6], 0
      %s44 = sshll.u32 %s3, 4
      %s45 = int_to_ptr.hbm [resolvable:$true] %s44
      %s46 = sshll.u32 [#allocation7], 4
      %s47 = int_to_ptr.vmem [resolvable:$true] %s46
      %52 = dma.hbm_to_vmem [thread:$0]  %s45, 2048, %s47, [#allocation6], 128, 128, 8
    $region17: #{tpu_custom_call.1} parent=1 // pred_fallthru
      _
    // Predicated region
    $region18: #{tpu_custom_call.1} parent=1 // pred_check
      _
    $region19: #{tpu_custom_call.1} parent=1 // pred_check_branch
      %54 = sbr.rel (0) target = $region21
    $region20: #{tpu_custom_call.1} parent=1 // pred_region
      _
    $region21: #{tpu_custom_call.1} parent=1 // pred_fallthru
      _
    // Predicated region
    $region22: #{tpu_custom_call.1} parent=1 // pred_check
      _
    $region23: #{tpu_custom_call.1} parent=1 // pred_check_branch
      %56 = sbr.rel (0) target = $region25
    $region24: #{tpu_custom_call.1} parent=1 // pred_region
      %58 = vsyncadd [#allocation9], 0
      %s59 = sshll.u32 %s5, 4
      %s60 = int_to_ptr.hbm [resolvable:$true] %s59
      %s61 = sshll.u32 [#allocation8], 4
      %s62 = int_to_ptr.vmem [resolvable:$true] %s61
      %67 = dma.hbm_to_vmem [thread:$0]  %s60, 2048, %s62, [#allocation9], 128, 128, 8
    $region25: #{tpu_custom_call.1} parent=1 // pred_fallthru
      _
    // Predicated region
    $region26: #{tpu_custom_call.1} parent=1 // pred_check
      _
    $region27: #{tpu_custom_call.1} parent=1 // pred_check_branch
      %69 = sbr.rel (0) target = $region29
    $region28: #{tpu_custom_call.1} parent=1 // pred_region
      _
    $region29: #{tpu_custom_call.1} parent=1 // pred_fallthru
      _
    // Predicated region
    $region30: #{tpu_custom_call.1} parent=1 // pred_check
      _
    $region31: #{tpu_custom_call.1} parent=1 // pred_check_branch
      %71 = sbr.rel (0) target = $region33
    $region32: #{tpu_custom_call.1} parent=1 // pred_region
      %73 = dma.done [#allocation3], 128
    $region33: #{tpu_custom_call.1} parent=1 // pred_fallthru
      _
    // Predicated region
    $region34: #{tpu_custom_call.1} parent=1 // pred_check
      _
    $region35: #{tpu_custom_call.1} parent=1 // pred_check_branch
      %75 = sbr.rel (0) target = $region37
    $region36: #{tpu_custom_call.1} parent=1 // pred_region
      %77 = dma.done [#allocation6], 128
    $region37: #{tpu_custom_call.1} parent=1 // pred_fallthru
      _
    // Predicated region
    $region38: #{tpu_custom_call.1} parent=1 // pred_check
      _
    $region39: #{tpu_custom_call.1} parent=1 // pred_check_branch
      %79 = sbr.rel (0) target = $region41
    $region40: #{tpu_custom_call.1} parent=1 // pred_region
      %81 = dma.done [#allocation6], 2048
    $region41: #{tpu_custom_call.1} parent=1 // pred_fallthru
      _
    // Predicated region
    $region42: #{tpu_custom_call.1} parent=1 // pred_check
      _
    $region43: #{tpu_custom_call.1} parent=1 // pred_check_branch
      %83 = sbr.rel (0) target = $region45
    $region44: #{tpu_custom_call.1} parent=1 // pred_region
      %85 = dma.done [#allocation9], 2048
    $region45: #{tpu_custom_call.1} parent=1 // pred_fallthru
      _
    %v86 = vld [vmem:[#allocation2] sm:$0xff]
    %v87 = vld [vmem:[#allocation5] sm:$0xff]
    %v88 = vld [vmem:[%s2] sm:$0x1]
    %v90 = vperm.slane %v88, 0
    %vm92 = vcmask 64512
    %v94 = vsel %vm92, %v86, 0
    %96 = vmatpush.msra.mxu0 0.0
    %97 = vmatpush.msra.mxu0 0.0
    %98 = vmatpush.msra.mxu0 0.0
    %99 = vmatpush.msra.mxu0 0.0
    %100 = vmatpush.msra.mxu0 0.0
    %101 = vmatpush.msra.mxu0 0.0
    %102 = vmatpush.msra.mxu0 0.0
    %103 = vmatpush.msra.mxu0 0.0
    %104 = vmatpush.msra.mxu0 0.0
    %105 = vmatpush.msra.mxu0 0.0
    %106 = vmatpush.msra.mxu0 0.0
    %107 = vmatpush.msra.mxu0 0.0
    %108 = vmatpush.msra.mxu0 0.0
    %109 = vmatpush.msra.mxu0 0.0
    %110 = vmatpush.msra.mxu0 0.0
    %111 = vmatpush.msra.mxu0 %v87
    %112 = vmatmul.f32.gmra.mxu0 %v94
    %v113 = vpop.f32.mrf.mxu0
    %v114 = vadd.f32 %v90, %v113
    %115 = vdwg.mxu0
    %v116 = vtanh.pop %v114
    %v117 = vld [vmem:[#allocation7] sm:$0xff]
    %v118 = vld [vmem:[#allocation7 + $0x8] sm:$0xff]
    %v119 = vld [vmem:[#allocation7 + $0x10] sm:$0xff]
    %v120 = vld [vmem:[#allocation7 + $0x18] sm:$0xff]
    %v121 = vld [vmem:[#allocation7 + $0x20] sm:$0xff]
    %v122 = vld [vmem:[#allocation7 + $0x28] sm:$0xff]
    %v123 = vld [vmem:[#allocation7 + $0x30] sm:$0xff]
    %v124 = vld [vmem:[#allocation7 + $0x38] sm:$0xff]
    %v125 = vld [vmem:[#allocation7 + $0x40] sm:$0xff]
    %v126 = vld [vmem:[#allocation7 + $0x48] sm:$0xff]
    %v127 = vld [vmem:[#allocation7 + $0x50] sm:$0xff]
    %v128 = vld [vmem:[#allocation7 + $0x58] sm:$0xff]
    %v129 = vld [vmem:[#allocation7 + $0x60] sm:$0xff]
    %v130 = vld [vmem:[#allocation7 + $0x68] sm:$0xff]
    %v131 = vld [vmem:[#allocation7 + $0x70] sm:$0xff]
    %v132 = vld [vmem:[#allocation7 + $0x78] sm:$0xff]
    %v133 = vld [vmem:[%s4] sm:$0x1]
    %v135 = vperm.slane %v133, 0
    %137 = vmatpush.msra.mxu0 %v132
    %138 = vmatpush.msra.mxu0 %v131
    %139 = vmatpush.msra.mxu0 %v130
    %140 = vmatpush.msra.mxu0 %v129
    %141 = vmatpush.msra.mxu0 %v128
    %142 = vmatpush.msra.mxu0 %v127
    %143 = vmatpush.msra.mxu0 %v126
    %144 = vmatpush.msra.mxu0 %v125
    %145 = vmatpush.msra.mxu0 %v124
    %146 = vmatpush.msra.mxu0 %v123
    %147 = vmatpush.msra.mxu0 %v122
    %148 = vmatpush.msra.mxu0 %v121
    %149 = vmatpush.msra.mxu0 %v120
    %150 = vmatpush.msra.mxu0 %v119
    %151 = vmatpush.msra.mxu0 %v118
    %152 = vmatpush.msra.mxu0 %v117
    %153 = vmatmul.f32.gmra.mxu0 %v116
    %v154 = vpop.f32.mrf.mxu0
    %v155 = vadd.f32 %v135, %v154
    %156 = vdwg.mxu0
    %v157 = vtanh.pop %v155
    %v158 = vld [vmem:[#allocation8] sm:$0xff]
    %v159 = vld [vmem:[#allocation8 + $0x8] sm:$0xff]
    %v160 = vld [vmem:[#allocation8 + $0x10] sm:$0xff]
    %v161 = vld [vmem:[#allocation8 + $0x18] sm:$0xff]
    %v162 = vld [vmem:[#allocation8 + $0x20] sm:$0xff]
    %v163 = vld [vmem:[#allocation8 + $0x28] sm:$0xff]
    %v164 = vld [vmem:[#allocation8 + $0x30] sm:$0xff]
    %v165 = vld [vmem:[#allocation8 + $0x38] sm:$0xff]
    %v166 = vld [vmem:[#allocation8 + $0x40] sm:$0xff]
    %v167 = vld [vmem:[#allocation8 + $0x48] sm:$0xff]
    %v168 = vld [vmem:[#allocation8 + $0x50] sm:$0xff]
    %v169 = vld [vmem:[#allocation8 + $0x58] sm:$0xff]
    %v170 = vld [vmem:[#allocation8 + $0x60] sm:$0xff]
    %v171 = vld [vmem:[#allocation8 + $0x68] sm:$0xff]
    %v172 = vld [vmem:[#allocation8 + $0x70] sm:$0xff]
    %v173 = vld [vmem:[#allocation8 + $0x78] sm:$0xff]
    %v174 = vld [vmem:[%s6] sm:$0x1]
    %v176 = vperm.slane %v174, 0
    %178 = vmatpush.msra.mxu0 %v173
    %179 = vmatpush.msra.mxu0 %v172
    %180 = vmatpush.msra.mxu0 %v171
    %181 = vmatpush.msra.mxu0 %v170
    %182 = vmatpush.msra.mxu0 %v169
    %183 = vmatpush.msra.mxu0 %v168
    %184 = vmatpush.msra.mxu0 %v167
    %185 = vmatpush.msra.mxu0 %v166
    %186 = vmatpush.msra.mxu0 %v165
    %187 = vmatpush.msra.mxu0 %v164
    %188 = vmatpush.msra.mxu0 %v163
    %189 = vmatpush.msra.mxu0 %v162
    %190 = vmatpush.msra.mxu0 %v161
    %191 = vmatpush.msra.mxu0 %v160
    %192 = vmatpush.msra.mxu0 %v159
    %193 = vmatpush.msra.mxu0 %v158
    %194 = vmatmul.f32.gmra.mxu0 %v157
    %v195 = vpop.f32.mrf.mxu0
    %v196 = vadd.f32 %v176, %v195
    %197 = vdwg.mxu0
    %198 = vst [vmem:[#allocation10] sm:$0xff] %v196
    // Predicated region
    $region46: #{tpu_custom_call.1} parent=1 // pred_check
      _
    $region47: #{tpu_custom_call.1} parent=1 // pred_check_branch
      %200 = sbr.rel (0) target = $region49
    $region48: #{tpu_custom_call.1} parent=1 // pred_region
      %202 = vsyncadd [#allocation4], 0
      %s204 = sshll.u32 [#allocation10], 4
      %s205 = int_to_ptr.vmem [resolvable:$true] %s204
      %s206 = sshll.u32 %s7, 4
      %s207 = int_to_ptr.hbm [resolvable:$true] %s206
      %209 = dma.vmem_to_hbm [thread:$0]  %s205, 128, %s207, [#allocation4]
    $region49: #{tpu_custom_call.1} parent=1 // pred_fallthru
      _
    // Predicated region
    $region50: #{tpu_custom_call.1} parent=1 // pred_check
      _
    $region51: #{tpu_custom_call.1} parent=1 // pred_check_branch
      %211 = sbr.rel (0) target = $region53
    $region52: #{tpu_custom_call.1} parent=1 // pred_region
      %213 = dma.done [#allocation4], 128
    $region53: #{tpu_custom_call.1} parent=1 // pred_fallthru
      _
    %214 = vsyncpa [#allocation3], 1
    %215 = vsyncpa [#allocation6], 1
    %216 = vsyncpa [#allocation9], 1
    %217 = vsyncpa [#allocation4], 1

</llo_original>
